<compile_context>
chip_gen: v5e
topology: v5e:2x2
jax: 0.10.0
libtpu: 0.0.40
codegen_flags: <defaults>
</compile_context>

<pallas_src>
import jax
import jax.numpy as jnp
from jax.experimental import pallas as pl
from jax.experimental.pallas import tpu as pltpu


# Rows per output tile.  Multiple of 8 sublanes; 1024 rows x D(f32) double-
# buffered is tiny compared to even v7x's 32 MiB default scoped VMEM, while
# still being big enough to amortize the ~0.35 us/step grid overhead.
_MAX_TILE_N = 1024


def _choose_tile_n(n):
    if n <= _MAX_TILE_N:
        return n            # block == full dim: always a legal TPU block shape
    return _MAX_TILE_N      # multiple of 8; partial last tile is handled by Pallas


def _make_bcast_kernel(num_rows):
    def kernel(*refs):
        in_refs = refs[:num_rows]
        out_refs = refs[num_rows:]
        for row_ref, out_ref in zip(in_refs, out_refs):
            # torch `x.view(1, -1).repeat(TILE_N, 1)` for this tile.
            out_ref[...] = jnp.broadcast_to(row_ref[...], out_ref.shape)
    return kernel


def repeat_rows(rows, n):
    """Tile each 1-D array in `rows` to (n, D_i) using ONE fused multi-output
    Pallas call (torch `x.view(1,-1).repeat(n, 1)` semantics for each row)."""
    rows = [jnp.asarray(r).reshape(1, -1) for r in rows]
    if not rows:
        return []

    tile_n = _choose_tile_n(n)
    grid = (pl.cdiv(n, tile_n),)

    # Inputs stay VMEM-resident (full (1, D) block, same block every step);
    # outputs are N-tiled so tile i-1's writeback DMA overlaps tile i's
    # (free) broadcast.
    in_specs = tuple(
        pl.BlockSpec((1, r.shape[1]), lambda i: (0, 0)) for r in rows)
    out_specs = tuple(
        pl.BlockSpec((tile_n, r.shape[1]), lambda i: (i, 0)) for r in rows)
    out_shape = tuple(
        jax.ShapeDtypeStruct((n, r.shape[1]), r.dtype) for r in rows)

    bytes_accessed = sum(
        (n + 1) * r.shape[1] * r.dtype.itemsize for r in rows)

    outs = pl.pallas_call(
        _make_bcast_kernel(len(rows)),
        out_shape=out_shape,
        grid=grid,
        in_specs=in_specs,
        out_specs=out_specs,
        compiler_params=pltpu.CompilerParams(
            dimension_semantics=("parallel",)),   # megacore split on v7x
        cost_estimate=pl.CostEstimate(
            flops=0, transcendentals=0, bytes_accessed=bytes_accessed),
    )(*rows)
    return list(outs)


def repeat_scalar(x, n):
    """torch `x.repeat(n)` for a scalar/size-1 id.  Done with jnp on purpose:
    a Pallas call for a handful of int32s is pure launch overhead with
    lane-sparse masked stores, whereas jnp lets XLA fuse the broadcast into
    the downstream consumer (per performance review)."""
    return jnp.tile(jnp.asarray(x).reshape(-1), n)


def _repeat_profiles_grouped(inp, keys_and_counts):
    """Group profile/attr keys by their repeat count and issue one fused
    multi-output Pallas call per group."""
    groups = {}
    for key, count in keys_and_counts:
        if key in inp:
            groups.setdefault(count, []).append(key)
    for count, keys in groups.items():
        outs = repeat_rows([inp[k].reshape(-1) for k in keys], count)
        for k, o in zip(keys, outs):
            inp[k] = o


def pair_input(data_mode, info, inp):
    """Mirrors PairInput.forward.  `inp` is a dict of jnp arrays."""
    inp = dict(inp)  # shallow copy; torch mutates in place, semantics identical
    drop_all = ('user_profile', 'target_user_profile',
                'item_attr', 'target_item_attr')
    if data_mode == 'user':
        n = inp['item'].shape[0]
        tn = inp['target_item'].shape[0]
        inp['user'] = repeat_scalar(inp['user'], n)
        inp['target_user'] = repeat_scalar(inp['target_user'], tn)
        if info == 1:
            _repeat_profiles_grouped(
                inp, [('user_profile', n), ('target_user_profile', tn)])
            inp.pop('item_attr', None)
            inp.pop('target_item_attr', None)
        else:
            for k in drop_all:
                inp.pop(k, None)
    elif data_mode == 'item':
        n = inp['user'].shape[0]
        tn = inp['target_user'].shape[0]
        inp['item'] = repeat_scalar(inp['item'], n)
        inp['target_item'] = repeat_scalar(inp['target_item'], tn)
        if info == 1:
            inp.pop('user_profile', None)
            inp.pop('target_user_profile', None)
            _repeat_profiles_grouped(
                inp, [('item_attr', n), ('target_item_attr', tn)])
        else:
            for k in drop_all:
                inp.pop(k, None)
    else:
        raise ValueError('Not valid data mode')
    return inp


if __name__ == "__main__":
    key = jax.random.PRNGKey(0)
    k1, k2, k3, k4, k5, k6 = jax.random.split(key, 6)

    n_items, n_target_items, d_prof, d_attr = 8, 8, 32, 32

    # 'user' mode sample: scalar user id, a set of candidate items, plus
    # side-information vectors.
    inp = {
        'user': jnp.asarray(3, dtype=jnp.int32),                                 # ()
        'target_user': jnp.asarray(3, dtype=jnp.int32),                          # ()
        'item': jax.random.randint(k1, (n_items,), 0, 100, jnp.int32),           # (8,)
        'target_item': jax.random.randint(k2, (n_target_items,), 0, 100,
                                          jnp.int32),                            # (8,)
        'user_profile': jax.random.normal(k3, (d_prof,), jnp.float32),           # (32,)
        'target_user_profile': jax.random.normal(k4, (d_prof,), jnp.float32),    # (32,)
        'item_attr': jax.random.normal(k5, (d_attr,), jnp.float32),              # (32,)
        'target_item_attr': jax.random.normal(k6, (d_attr,), jnp.float32),       # (32,)
    }

    out = pair_input('user', 1, inp)
    out = {k: jax.block_until_ready(v) for k, v in out.items()}

    # Reference checks (pure jnp) for the tensor semantics.
    assert out['user'].shape == (n_items,)
    assert bool(jnp.all(out['user'] == inp['user']))
    assert out['target_user'].shape == (n_target_items,)
    assert bool(jnp.all(out['target_user'] == inp['target_user']))
    assert out['user_profile'].shape == (n_items, d_prof)
    assert bool(jnp.allclose(
        out['user_profile'],
        jnp.broadcast_to(inp['user_profile'][None, :], (n_items, d_prof))))
    assert out['target_user_profile'].shape == (n_target_items, d_prof)
    assert bool(jnp.allclose(
        out['target_user_profile'],
        jnp.broadcast_to(inp['target_user_profile'][None, :],
                         (n_target_items, d_prof))))
    assert 'item_attr' not in out and 'target_item_attr' not in out

    # 'item' mode path.
    inp2 = dict(inp)
    inp2['user'] = jax.random.randint(k1, (n_items,), 0, 100, jnp.int32)
    inp2['target_user'] = jax.random.randint(k2, (n_target_items,), 0, 100,
                                             jnp.int32)
    inp2['item'] = jnp.asarray(7, dtype=jnp.int32)
    inp2['target_item'] = jnp.asarray(7, dtype=jnp.int32)
    out2 = pair_input('item', 1, inp2)
    out2 = {k: jax.block_until_ready(v) for k, v in out2.items()}
    assert out2['item'].shape == (n_items,)
    assert bool(jnp.all(out2['item'] == 7))
    assert out2['item_attr'].shape == (n_items, d_attr)
    assert bool(jnp.allclose(
        out2['item_attr'],
        jnp.broadcast_to(inp['item_attr'][None, :], (n_items, d_attr))))
    assert 'user_profile' not in out2

    # Extra: non-multiple-of-8 repeat count exercises the full-dim tile path,
    # and mismatched n / tn exercises the per-count grouping.
    odd = repeat_rows([inp['user_profile']], 10)[0]
    odd = jax.block_until_ready(odd)
    assert odd.shape == (10, d_prof)
    assert bool(jnp.allclose(
        odd, jnp.broadcast_to(inp['user_profile'][None, :], (10, d_prof))))

    print("KERNEL_OK")
</pallas_src>

<mosaic_0001>
module attributes {stable_mosaic.version = 11 : i64} {
  func.func @kernel(%arg0: i32, %arg1: memref<1x32xf32, #tpu.memory_space<vmem>>, %arg2: memref<1x32xf32, #tpu.memory_space<vmem>>, %arg3: memref<8x32xf32, #tpu.memory_space<vmem>>, %arg4: memref<8x32xf32, #tpu.memory_space<vmem>>) attributes {dimension_semantics = [#tpu.dimension_semantics<parallel>], iteration_bounds = array<i64: 1>, scalar_prefetch = 0 : i64, scratch_operands = 0 : i64, tpu.core_type = #tpu.core_type<tc>, window_params = [{pipeline_mode = #tpu.pipeline_mode<synchronous>, transform_indices = @transform_0, window_bounds = array<i64: 1, 32>}, {pipeline_mode = #tpu.pipeline_mode<synchronous>, transform_indices = @transform_1, window_bounds = array<i64: 1, 32>}, {transform_indices = @transform_2, window_bounds = array<i64: 8, 32>}, {transform_indices = @transform_3, window_bounds = array<i64: 8, 32>}]} {
    %c0 = arith.constant 0 : index
    %c0_0 = arith.constant 0 : index
    %0 = vector.load %arg1[%c0, %c0_0] : memref<1x32xf32, #tpu.memory_space<vmem>>, vector<1x32xf32>
    %1 = vector.shape_cast %0 : vector<1x32xf32> to vector<1x32xf32>
    %2 = vector.broadcast %1 : vector<1x32xf32> to vector<8x32xf32>
    %c0_1 = arith.constant 0 : index
    %c0_2 = arith.constant 0 : index
    %3 = vector.load %arg3[%c0_1, %c0_2] : memref<8x32xf32, #tpu.memory_space<vmem>>, vector<8x32xf32>
    tpu.vector_store %arg3[%c0_1, %c0_2], %2 {strides = array<i32>} : memref<8x32xf32, #tpu.memory_space<vmem>>, vector<8x32xf32>,
    %c0_3 = arith.constant 0 : index
    %c0_4 = arith.constant 0 : index
    %4 = vector.load %arg2[%c0_3, %c0_4] : memref<1x32xf32, #tpu.memory_space<vmem>>, vector<1x32xf32>
    %5 = vector.shape_cast %4 : vector<1x32xf32> to vector<1x32xf32>
    %6 = vector.broadcast %5 : vector<1x32xf32> to vector<8x32xf32>
    %c0_5 = arith.constant 0 : index
    %c0_6 = arith.constant 0 : index
    %7 = vector.load %arg4[%c0_5, %c0_6] : memref<8x32xf32, #tpu.memory_space<vmem>>, vector<8x32xf32>
    tpu.vector_store %arg4[%c0_5, %c0_6], %6 {strides = array<i32>} : memref<8x32xf32, #tpu.memory_space<vmem>>, vector<8x32xf32>,
    return
  }
  func.func @transform_0(%arg0: i32) -> (i32, i32) {
    %c0_i32 = arith.constant 0 : i32
    %c0_i32_0 = arith.constant 0 : i32
    %c0_i32_1 = arith.constant 0 : i32
    return %c0_i32, %c0_i32_0 : i32, i32
  }
  func.func @transform_1(%arg0: i32) -> (i32, i32) {
    %c0_i32 = arith.constant 0 : i32
    %c0_i32_0 = arith.constant 0 : i32
    %c0_i32_1 = arith.constant 0 : i32
    return %c0_i32, %c0_i32_0 : i32, i32
  }
  func.func @transform_2(%arg0: i32) -> (i32, i32) {
    %c0_i32 = arith.constant 0 : i32
    %c0_i32_0 = arith.constant 0 : i32
    return %arg0, %c0_i32 : i32, i32
  }
  func.func @transform_3(%arg0: i32) -> (i32, i32) {
    %c0_i32 = arith.constant 0 : i32
    %c0_i32_0 = arith.constant 0 : i32
    return %arg0, %c0_i32 : i32, i32
  }
}

</mosaic_0001>

<llo_original>
// kernel: tpu_custom_call.1
$region0: #{tpu_custom_call.1}
  #allocation0 [shape = 'u32[]', space=smem, size = 0x4, offset = 0x4, fixed_abs, tag = 'smem constant byte address 0x4 - core index']
  #allocation1 [shape = 'u32[72,128]{1,0:T(1,128)}', space=vmem, size = 0x9000, scoped, tag = 'internal scratch']
  %s0 = inlined_call_operand.hbm [shape: f32[1,32], index: 0, kind: input, shape index: {}]
  %s1 = inlined_call_operand.hbm [shape: f32[1,32], index: 1, kind: input, shape index: {}]
  %s2 = inlined_call_operand.hbm [shape: f32[8,32], index: 2, kind: output, shape index: {0}]
  %s3 = inlined_call_operand.hbm [shape: f32[8,32], index: 3, kind: output, shape index: {1}]
  %4 = xla_tuple %s2, %s3
  %s5 = sld [smem:[#allocation0]]
  $region34: #{tpu_custom_call.1} parent=0
    _
  %s7 = ssub.s32 1, %s5
  %s8 = scalar_select 0, %s7, %s5
  $region1: #{tpu_custom_call.1} parent=0
    #allocation2 [shape = 'u8[512]{0}', space=vmem, size = 0x400, scoped, tag = 'input window, operand 0, single buffered']
    #allocation3 [shape = 's32[1]{0}', space=sflag, size = 0x4, scoped, tag = 'scoped memory for tpu_custom_call.1']
    #allocation4 [shape = 's32[1]{0}', space=sflag, size = 0x4, scoped, tag = 'scoped memory for tpu_custom_call.1']
    #allocation5 [shape = 'u8[512]{0}', space=vmem, size = 0x400, scoped, tag = 'input window, operand 1, single buffered']
    #allocation6 [shape = 's32[1]{0}', space=sflag, size = 0x4, scoped, tag = 'scoped memory for tpu_custom_call.1']
    #allocation7 [shape = 'u8[4096]{0}', space=vmem, size = 0x1000, scoped, tag = 'output window, operand 0, single buffered']
    #allocation8 [shape = 'u8[4096]{0}', space=vmem, size = 0x1000, scoped, tag = 'output window, operand 1, single buffered']
    #allocation9 [shape = 's32[1]{0}', space=sflag, size = 0x4, scoped, tag = 'scoped memory for tpu_custom_call.1']
    %9 = vsyncpa [#allocation3], 0
    %10 = vsyncpa [#allocation6], 0
    %11 = vsyncpa [#allocation4], 0
    %12 = vsyncpa [#allocation9], 0
    // Predicated region
    $region2: #{tpu_custom_call.1} parent=1 // pred_check
      _
    $region3: #{tpu_custom_call.1} parent=1 // pred_check_branch
      %14 = sbr.rel (0) target = $region5
    $region4: #{tpu_custom_call.1} parent=1 // pred_region
      %16 = vsyncadd [#allocation3], 0
      %s18 = sshll.u32 %s0, 4
      %s19 = int_to_ptr.hbm [resolvable:$true] %s18
      %s20 = sshll.u32 [#allocation2], 4
      %s21 = int_to_ptr.vmem [resolvable:$true] %s20
      %23 = dma.hbm_to_vmem [thread:$0]  %s19, 16, %s21, [#allocation3]
    $region5: #{tpu_custom_call.1} parent=1 // pred_fallthru
      _
    // Predicated region
    $region6: #{tpu_custom_call.1} parent=1 // pred_check
      _
    $region7: #{tpu_custom_call.1} parent=1 // pred_check_branch
      %25 = sbr.rel (0) target = $region9
    $region8: #{tpu_custom_call.1} parent=1 // pred_region
      %27 = vsyncadd [#allocation6], 0
      %s29 = sshll.u32 %s1, 4
      %s30 = int_to_ptr.hbm [resolvable:$true] %s29
      %s31 = sshll.u32 [#allocation5], 4
      %s32 = int_to_ptr.vmem [resolvable:$true] %s31
      %34 = dma.hbm_to_vmem [thread:$0]  %s30, 16, %s32, [#allocation6]
    $region9: #{tpu_custom_call.1} parent=1 // pred_fallthru
      _
    // Predicated region
    $region10: #{tpu_custom_call.1} parent=1 // pred_check
      _
    $region11: #{tpu_custom_call.1} parent=1 // pred_check_branch
      %36 = sbr.rel (0) target = $region13
    $region12: #{tpu_custom_call.1} parent=1 // pred_region
      %38 = dma.done [#allocation3], 16
    $region13: #{tpu_custom_call.1} parent=1 // pred_fallthru
      _
    // Predicated region
    $region14: #{tpu_custom_call.1} parent=1 // pred_check
      _
    $region15: #{tpu_custom_call.1} parent=1 // pred_check_branch
      %40 = sbr.rel (0) target = $region17
    $region16: #{tpu_custom_call.1} parent=1 // pred_region
      %42 = dma.done [#allocation6], 16
    $region17: #{tpu_custom_call.1} parent=1 // pred_fallthru
      _
    %v43 = vld [vmem:[#allocation2] sm:$0x1]
    %v45 = vperm.slane %v43, 0
    %vm47 = vcmask 261120
    %48 = vst.msk [vmem:[#allocation7] sm:$0xff] %vm47, %v45
    %v49 = vld [vmem:[#allocation5] sm:$0x1]
    %v51 = vperm.slane %v49, 0
    %53 = vst.msk [vmem:[#allocation8] sm:$0xff] %vm47, %v51
    // Predicated region
    $region18: #{tpu_custom_call.1} parent=1 // pred_check
      _
    $region19: #{tpu_custom_call.1} parent=1 // pred_check_branch
      %55 = sbr.rel (0) target = $region21
    $region20: #{tpu_custom_call.1} parent=1 // pred_region
      %57 = vsyncadd [#allocation4], 0
      %s59 = sshll.u32 [#allocation7], 4
      %s60 = int_to_ptr.vmem [resolvable:$true] %s59
      %s61 = sshll.u32 %s2, 4
      %s62 = int_to_ptr.hbm [resolvable:$true] %s61
      %64 = dma.vmem_to_hbm [thread:$0]  %s60, 128, %s62, [#allocation4]
    $region21: #{tpu_custom_call.1} parent=1 // pred_fallthru
      _
    // Predicated region
    $region22: #{tpu_custom_call.1} parent=1 // pred_check
      _
    $region23: #{tpu_custom_call.1} parent=1 // pred_check_branch
      %66 = sbr.rel (0) target = $region25
    $region24: #{tpu_custom_call.1} parent=1 // pred_region
      %68 = vsyncadd [#allocation9], 0
      %s70 = sshll.u32 [#allocation8], 4
      %s71 = int_to_ptr.vmem [resolvable:$true] %s70
      %s72 = sshll.u32 %s3, 4
      %s73 = int_to_ptr.hbm [resolvable:$true] %s72
      %75 = dma.vmem_to_hbm [thread:$0]  %s71, 128, %s73, [#allocation9]
    $region25: #{tpu_custom_call.1} parent=1 // pred_fallthru
      _
    // Predicated region
    $region26: #{tpu_custom_call.1} parent=1 // pred_check
      _
    $region27: #{tpu_custom_call.1} parent=1 // pred_check_branch
      %77 = sbr.rel (0) target = $region29
    $region28: #{tpu_custom_call.1} parent=1 // pred_region
      %79 = dma.done [#allocation4], 128
    $region29: #{tpu_custom_call.1} parent=1 // pred_fallthru
      _
    // Predicated region
    $region30: #{tpu_custom_call.1} parent=1 // pred_check
      _
    $region31: #{tpu_custom_call.1} parent=1 // pred_check_branch
      %81 = sbr.rel (0) target = $region33
    $region32: #{tpu_custom_call.1} parent=1 // pred_region
      %83 = dma.done [#allocation9], 128
    $region33: #{tpu_custom_call.1} parent=1 // pred_fallthru
      _
    %84 = vsyncpa [#allocation3], 1
    %85 = vsyncpa [#allocation6], 1
    %86 = vsyncpa [#allocation4], 1
    %87 = vsyncpa [#allocation9], 1

</llo_original>
